<compile_context>
chip_gen: v7x
topology: tpu7x:2x2x1
jax: 0.10.0
libtpu: 0.0.40
codegen_flags: <defaults>
</compile_context>

<pallas_src>
import functools

import numpy as np
import jax
import jax.numpy as jnp
from jax import lax
from jax.experimental import pallas as pl
from jax.experimental.pallas import tpu as pltpu

MAXB = 8            # default padded boxes per label group
MAXG = 8            # default padded number of label groups
MIN_AREA = 5.0      # compute_iou(min_area=5)
SENTINEL = -1e8     # padding box -> never overlaps anything real (IoU == -1)


# ---------------------------------------------------------------------------
# Kernel: one grid step == one label group.
#   bb1_ref / bb2_ref : (4, P) f32, P = maxb*maxb pre-broadcast pairs,
#                       pair p = a*maxb + b (row-major, matching the
#                       reference's strict '>' scan order).
#   swap_ref          : (maxg,) int32 scalar-prefetch (SMEM); 1 iff the group
#                       was swapped (bb1 held the clean boxes).
#   loss_ref          : (1, 1) resident accumulator across the group axis.
# ---------------------------------------------------------------------------
def _iou_select_smooth_l1_kernel(swap_ref, bb1_ref, bb2_ref, loss_ref, *, beta):
    g = pl.program_id(0)

    @pl.when(g == 0)
    def _init():
        loss_ref[...] = jnp.zeros_like(loss_ref)

    bb1 = bb1_ref[...]                      # (4, P)
    bb2 = bb2_ref[...]                      # (4, P)
    P = bb1.shape[-1]

    x1a, y1a, x2a, y2a = bb1[0:1, :], bb1[1:2, :], bb1[2:3, :], bb1[3:4, :]
    x1b, y1b, x2b, y2b = bb2[0:1, :], bb2[1:2, :], bb2[2:3, :], bb2[3:4, :]

    x_left = jnp.maximum(x1a, x1b)          # (1, P)
    y_top = jnp.maximum(y1a, y1b)
    x_right = jnp.minimum(x2a, x2b)
    y_bottom = jnp.minimum(y2a, y2b)

    inter = (x_right - x_left) * (y_bottom - y_top)
    area1 = (x2a - x1a) * (y2a - y1a)
    area2 = (x2b - x1b) * (y2b - y1b)

    invalid = jnp.logical_or(
        jnp.logical_or(x_right < x_left, y_bottom < y_top),
        inter < MIN_AREA)
    union = jnp.where(invalid, 1.0, area1 + area2 - inter)   # guard 0/0 NaN
    iou = jnp.where(invalid, -1.0, inter / union)            # (1, P)

    # First (row-major) argmax == the reference's strict '>' update order.
    pair_idx = lax.broadcasted_iota(jnp.int32, (1, P), 1)
    max_iou = jnp.max(iou, axis=1, keepdims=True)                      # (1, 1)
    first_best = jnp.min(jnp.where(iou >= max_iou, pair_idx, P),
                         axis=1, keepdims=True)                        # (1, 1)

    onehot = pair_idx == first_best                                    # (1, P)
    valid = (max_iou > -1.0).astype(jnp.float32)                       # (1, 1)
    kept1 = jnp.sum(jnp.where(onehot, bb1, 0.0), axis=1, keepdims=True) * valid
    kept2 = jnp.sum(jnp.where(onehot, bb2, 0.0), axis=1, keepdims=True) * valid
    # kept1/kept2: (4, 1); zeros when no pair beats IoU = -1 (reference branch).

    sw = swap_ref[g].astype(jnp.float32)        # 1.0 if this group was swapped
    pred = kept1 + sw * (kept2 - kept1)         # kept_aug   (final_aug)
    target = kept2 + sw * (kept1 - kept2)       # kept_clean (final)

    # Fused smooth-L1 (sum). Padded / no-overlap groups contribute exactly 0.
    target = jnp.where(jnp.isnan(target), 0.0, target)   # ref: target[isnan]=0
    diff = jnp.abs(pred - target)
    l = jnp.where(diff < beta, 0.5 * diff * diff / beta, diff - 0.5 * beta)
    loss_ref[...] += jnp.sum(l, axis=0, keepdims=True)


@functools.partial(jax.jit, static_argnames=("beta", "scale"))
def _constellation_loss_device(swap, bb1_pairs, bb2_pairs, *, beta, scale):
    """swap: (maxg,) i32; bb*_pairs: (maxg, 4, P) f32. Returns scalar loss."""
    maxg, _, P = bb1_pairs.shape
    loss_sum = pl.pallas_call(
        functools.partial(_iou_select_smooth_l1_kernel, beta=beta),
        out_shape=jax.ShapeDtypeStruct((1, 1), jnp.float32),
        grid_spec=pltpu.PrefetchScalarGridSpec(
            num_scalar_prefetch=1,
            grid=(maxg,),
            in_specs=[
                pl.BlockSpec((None, 4, P), lambda g, sw: (g, 0, 0)),
                pl.BlockSpec((None, 4, P), lambda g, sw: (g, 0, 0)),
            ],
            out_specs=pl.BlockSpec((1, 1), lambda g, sw: (0, 0)),
        ),
        compiler_params=pltpu.CompilerParams(
            # loss accumulates across the group axis -> reduction -> arbitrary.
            # (If this ever scales to many groups on v7x, emit per-group partial
            #  losses instead and mark the axis 'parallel' for both TCs.)
            dimension_semantics=("arbitrary",)),
    )(swap, bb1_pairs, bb2_pairs)
    return scale * loss_sum[0, 0]


# ---------------------------------------------------------------------------
# Host-side glue: label bookkeeping is data-dependent host control flow
# (np.unique / boolean masks of dynamic size) done once in numpy; then a single
# batched Pallas launch.
# ---------------------------------------------------------------------------
def _pad_boxes(b, maxb):
    out = np.full((maxb, 4), SENTINEL, dtype=np.float32)
    b = np.asarray(b, dtype=np.float32).reshape(-1, 4)
    out[: b.shape[0]] = b
    return out


def _expand_pairs(bb_big, bb_small, maxb):
    """(4, maxb*maxb) pre-broadcast pair layout, pair p = a*maxb + b."""
    big = _pad_boxes(bb_big, maxb)
    small = _pad_boxes(bb_small, maxb)
    a_exp = np.repeat(big, maxb, axis=0)        # row p -> big[p // maxb]
    b_exp = np.tile(small, (maxb, 1))           # row p -> small[p % maxb]
    return np.ascontiguousarray(a_exp.T), np.ascontiguousarray(b_exp.T)


class ConstellationLossBBOX:
    def __init__(self, beta=1.0 / 9.0, K=4, max_contrastive_loss=1,
                 loss_weight=1.0, reduction="mean", activated=False):
        self.K = K
        self.beta = beta
        self.reduction = reduction
        self.loss_weight = loss_weight
        self.max_contrastive_loss = max_contrastive_loss   # unused (as in ref)

    def forward(self, label_targets, label_targets_aug, label_targets_aug_true,
                label_targets_true, aug_bbox_pred, bbox_pred, bbox_targets,
                aug_bbox_targets, img_metas, gt_labels_aug, min_size,
                base_bbox_pred, gt_base_bbox, weight=None, reduction_override=None):
        label_targets = np.asarray(label_targets)
        label_targets_aug = np.asarray(label_targets_aug)
        aug_bbox_pred = np.array(aug_bbox_pred, dtype=np.float32)
        bbox_pred = np.array(bbox_pred, dtype=np.float32)

        # TODO(synk): rotation-undo ('90'/'-90'/'180'/'-180') from img_metas is
        # per-image string-driven metadata control flow; only the identity path
        # ('vanilla' / flips, which the reference also leaves untouched) is kept.

        aug_mask = np.isin(label_targets_aug, np.unique(label_targets))
        mask = np.isin(label_targets, np.unique(label_targets_aug))

        bbox_pred = bbox_pred[mask]
        label_targets_m = label_targets[mask]
        aug_bbox_pred = aug_bbox_pred[aug_mask]
        label_targets_aug_m = label_targets_aug[aug_mask]

        labels = np.unique(label_targets_m)
        G = int(labels.shape[0])
        if G == 0:
            # Reference would raise on torch.stack([]); return a zero loss.
            return jnp.float32(0.0)

        maxb = MAXB
        for lbl in labels.tolist():
            maxb = max(maxb,
                       int(np.sum(label_targets_m == lbl)),
                       int(np.sum(label_targets_aug_m == lbl)))
        maxg = max(MAXG, G)

        P = maxb * maxb
        bb1_pairs = np.full((maxg, 4, P), SENTINEL, dtype=np.float32)
        bb2_pairs = np.full((maxg, 4, P), SENTINEL, dtype=np.float32)
        swap = np.zeros((maxg,), dtype=np.int32)

        for gi, lbl in enumerate(labels.tolist()):
            bb2 = bbox_pred[label_targets_m == lbl]          # clean boxes
            bb1 = aug_bbox_pred[label_targets_aug_m == lbl]  # aug boxes
            if bb1.shape[0] >= bb2.shape[0]:                 # ref: compute_iou(aug, clean)
                big, small = bb1, bb2
                swap[gi] = 0
            else:                                            # ref: compute_iou(clean, aug)
                big, small = bb2, bb1
                swap[gi] = 1
            bb1_pairs[gi], bb2_pairs[gi] = _expand_pairs(big, small, maxb)

        scale = float(self.loss_weight) / (4.0 * G)          # 'mean' over (G, 4)
        return _constellation_loss_device(
            jnp.asarray(swap), jnp.asarray(bb1_pairs), jnp.asarray(bb2_pairs),
            beta=float(self.beta), scale=scale)


# ---------------------------------------------------------------------------
# Pure-numpy reference of the module (vanilla-transform path) for verification.
# ---------------------------------------------------------------------------
def _reference_loss_numpy(label_targets, label_targets_aug, aug_bbox_pred,
                          bbox_pred, beta, loss_weight, min_area=5.0):
    lt = np.asarray(label_targets)
    lta = np.asarray(label_targets_aug)
    bp = np.asarray(bbox_pred, dtype=np.float32)
    abp = np.asarray(aug_bbox_pred, dtype=np.float32)

    aug_mask = np.isin(lta, np.unique(lt))
    mask = np.isin(lt, np.unique(lta))
    bp, lt = bp[mask], lt[mask]
    abp, lta = abp[aug_mask], lta[aug_mask]

    def compute_iou(bb1, bb2):
        biggest = -1.0
        k1 = np.zeros(4, np.float32)
        k2 = np.zeros(4, np.float32)
        for a in range(bb1.shape[0]):
            for b in range(bb2.shape[0]):
                x_left = max(bb1[a][0], bb2[b][0])
                y_top = max(bb1[a][1], bb2[b][1])
                x_right = min(bb1[a][2], bb2[b][2])
                y_bottom = min(bb1[a][3], bb2[b][3])
                if x_right < x_left or y_bottom < y_top:
                    iou = -1.0
                else:
                    inter = (x_right - x_left) * (y_bottom - y_top)
                    if inter < min_area:
                        iou = -1.0
                    else:
                        a1 = (bb1[a][2] - bb1[a][0]) * (bb1[a][3] - bb1[a][1])
                        a2 = (bb2[b][2] - bb2[b][0]) * (bb2[b][3] - bb2[b][1])
                        iou = inter / np.float32(a1 + a2 - inter)
                if iou > biggest:
                    biggest = iou
                    k1, k2 = bb1[a], bb2[b]
        return k1, k2

    final, final_aug = [], []
    for lbl in np.unique(lt).tolist():
        bb2 = bp[lt == lbl]
        bb1 = abp[lta == lbl]
        if bb1.shape[0] >= bb2.shape[0]:
            ka, kc = compute_iou(bb1, bb2)
        else:
            kc, ka = compute_iou(bb2, bb1)
        final_aug.append(ka)
        final.append(kc)
    final = np.stack(final).astype(np.float32)
    final_aug = np.stack(final_aug).astype(np.float32)
    diff = np.abs(final_aug - final)
    loss = np.where(diff < beta, 0.5 * diff * diff / beta, diff - 0.5 * beta)
    return loss_weight * float(loss.mean())


if __name__ == "__main__":
    key = jax.random.PRNGKey(0)
    k1, k2, k3 = jax.random.split(key, 3)

    # Clean predictions: 5 boxes, labels [0, 1, 2, 3, 1]
    N = 5
    xy = jax.random.uniform(k1, (N, 2), minval=100.0, maxval=500.0)
    wh = jax.random.uniform(k2, (N, 2), minval=60.0, maxval=200.0)
    bbox_pred = jnp.concatenate([xy, xy + wh], axis=1)            # (5, 4)
    label_targets = jnp.array([0, 1, 2, 3, 1], dtype=jnp.int32)

    # Augmented predictions: 4 boxes, labels [0, 1, 2, 2], jittered copies
    label_targets_aug = jnp.array([0, 1, 2, 2], dtype=jnp.int32)
    base_idx = jnp.array([0, 1, 2, 2])
    jitter = jax.random.uniform(k3, (4, 4), minval=-20.0, maxval=20.0)
    aug_bbox_pred = bbox_pred[base_idx] + jitter                  # (4, 4)

    img_metas = [
        {"applied_transformation": ["vanilla"], "img_shape": (800, 800, 3)},
        {"applied_transformation": ["vanilla"], "img_shape": (800, 800, 3)},
    ]
    gt_labels_aug = [np.array([0, 1]), np.array([2, 2])]

    loss_mod = ConstellationLossBBOX(beta=1.0 / 9.0, loss_weight=1.0)
    loss = loss_mod.forward(
        label_targets, label_targets_aug, None, None,
        aug_bbox_pred, bbox_pred, None, None,
        img_metas, gt_labels_aug, None, None, None)
    loss = jax.block_until_ready(loss)

    ref = _reference_loss_numpy(label_targets, label_targets_aug,
                                aug_bbox_pred, bbox_pred,
                                beta=1.0 / 9.0, loss_weight=1.0)

    assert np.isfinite(float(loss))
    assert np.allclose(float(loss), ref, rtol=1e-3, atol=1e-3), (float(loss), ref)
    print("KERNEL_OK")
</pallas_src>

<mosaic_0001>
module attributes {stable_mosaic.version = 11 : i64} {
  func.func @_iou_select_smooth_l1_kernel(%arg0: i32, %arg1: memref<8xi32, #tpu.memory_space<smem>>, %arg2: memref<1x4x64xf32, #tpu.memory_space<vmem>>, %arg3: memref<1x4x64xf32, #tpu.memory_space<vmem>>, %arg4: memref<1x1xf32, #tpu.memory_space<vmem>>) attributes {dimension_semantics = [#tpu.dimension_semantics<arbitrary>], iteration_bounds = array<i64: 8>, scalar_prefetch = 1 : i64, scratch_operands = 0 : i64, tpu.core_type = #tpu.core_type<tc>, window_params = [{transform_indices = @transform_0, window_bounds = array<i64: 1, 4, 64>}, {transform_indices = @transform_1, window_bounds = array<i64: 1, 4, 64>}, {pipeline_mode = #tpu.pipeline_mode<synchronous>, transform_indices = @transform_2, window_bounds = array<i64: 1, 1>}]} {
    %c0_i32 = arith.constant 0 : i32
    %0 = arith.cmpi eq, %arg0, %c0_i32 : i32
    %1 = arith.extui %0 : i1 to i32
    %c0_i32_0 = arith.constant 0 : i32
    %2 = arith.cmpi ne, %1, %c0_i32_0 : i32
    scf.if %2 {
      %cst_25 = arith.constant 0.000000e+00 : f32
      %103 = vector.broadcast %cst_25 : f32 to vector<1x1xf32>
      %c0_26 = arith.constant 0 : index
      %c0_27 = arith.constant 0 : index
      %104 = vector.load %arg4[%c0_26, %c0_27] : memref<1x1xf32, #tpu.memory_space<vmem>>, vector<1x1xf32>
      tpu.vector_store %arg4[%c0_26, %c0_27], %103 {strides = array<i32>} : memref<1x1xf32, #tpu.memory_space<vmem>>, vector<1x1xf32>,
    } else {
    }
    %c0 = arith.constant 0 : index
    %c0_1 = arith.constant 0 : index
    %c0_2 = arith.constant 0 : index
    %3 = vector.load %arg2[%c0, %c0_1, %c0_2] : memref<1x4x64xf32, #tpu.memory_space<vmem>>, vector<1x4x64xf32>
    %4 = vector.shape_cast %3 : vector<1x4x64xf32> to vector<4x64xf32>
    %c0_3 = arith.constant 0 : index
    %c0_4 = arith.constant 0 : index
    %c0_5 = arith.constant 0 : index
    %5 = vector.load %arg3[%c0_3, %c0_4, %c0_5] : memref<1x4x64xf32, #tpu.memory_space<vmem>>, vector<1x4x64xf32>
    %6 = vector.shape_cast %5 : vector<1x4x64xf32> to vector<4x64xf32>
    %7 = vector.extract_strided_slice %4 {offsets = [0, 0], sizes = [1, 64], strides = [1, 1]} : vector<4x64xf32> to vector<1x64xf32>
    %8 = vector.extract_strided_slice %4 {offsets = [1, 0], sizes = [1, 64], strides = [1, 1]} : vector<4x64xf32> to vector<1x64xf32>
    %9 = vector.extract_strided_slice %4 {offsets = [2, 0], sizes = [1, 64], strides = [1, 1]} : vector<4x64xf32> to vector<1x64xf32>
    %10 = vector.extract_strided_slice %4 {offsets = [3, 0], sizes = [1, 64], strides = [1, 1]} : vector<4x64xf32> to vector<1x64xf32>
    %11 = vector.extract_strided_slice %6 {offsets = [0, 0], sizes = [1, 64], strides = [1, 1]} : vector<4x64xf32> to vector<1x64xf32>
    %12 = vector.extract_strided_slice %6 {offsets = [1, 0], sizes = [1, 64], strides = [1, 1]} : vector<4x64xf32> to vector<1x64xf32>
    %13 = vector.extract_strided_slice %6 {offsets = [2, 0], sizes = [1, 64], strides = [1, 1]} : vector<4x64xf32> to vector<1x64xf32>
    %14 = vector.extract_strided_slice %6 {offsets = [3, 0], sizes = [1, 64], strides = [1, 1]} : vector<4x64xf32> to vector<1x64xf32>
    %15 = arith.maximumf %7, %11 : vector<1x64xf32>
    %16 = arith.maximumf %8, %12 : vector<1x64xf32>
    %17 = arith.minimumf %9, %13 : vector<1x64xf32>
    %18 = arith.minimumf %10, %14 : vector<1x64xf32>
    %19 = arith.subf %17, %15 : vector<1x64xf32>
    %20 = arith.subf %18, %16 : vector<1x64xf32>
    %21 = arith.mulf %19, %20 : vector<1x64xf32>
    %22 = arith.subf %9, %7 : vector<1x64xf32>
    %23 = arith.subf %10, %8 : vector<1x64xf32>
    %24 = arith.mulf %22, %23 : vector<1x64xf32>
    %25 = arith.subf %13, %11 : vector<1x64xf32>
    %26 = arith.subf %14, %12 : vector<1x64xf32>
    %27 = arith.mulf %25, %26 : vector<1x64xf32>
    %28 = arith.cmpf olt, %17, %15 : vector<1x64xf32>
    %29 = arith.cmpf olt, %18, %16 : vector<1x64xf32>
    %30 = arith.ori %28, %29 : vector<1x64xi1>
    %cst = arith.constant 5.000000e+00 : f32
    %31 = vector.broadcast %cst : f32 to vector<1x64xf32>
    %32 = arith.cmpf olt, %21, %31 : vector<1x64xf32>
    %33 = arith.ori %30, %32 : vector<1x64xi1>
    %34 = arith.addf %24, %27 : vector<1x64xf32>
    %35 = arith.subf %34, %21 : vector<1x64xf32>
    %cst_6 = arith.constant 1.000000e+00 : f32
    %36 = vector.broadcast %cst_6 : f32 to vector<1x64xf32>
    %37 = arith.select %33, %36, %35 : vector<1x64xi1>, vector<1x64xf32>
    %38 = arith.divf %21, %37 : vector<1x64xf32>
    %cst_7 = arith.constant -1.000000e+00 : f32
    %39 = vector.broadcast %cst_7 : f32 to vector<1x64xf32>
    %40 = arith.select %33, %39, %38 : vector<1x64xi1>, vector<1x64xf32>
    %41 = tpu.iota {dimensions = array<i32: 1>} : vector<1x64xi32>
    %cst_8 = arith.constant dense<0xFF800000> : vector<1xf32>
    %42 = vector.multi_reduction <maximumf>, %40, %cst_8 [1] : vector<1x64xf32> to vector<1xf32>
    %43 = vector.shape_cast %42 : vector<1xf32> to vector<1x1xf32>
    %44 = vector.broadcast %43 : vector<1x1xf32> to vector<1x64xf32>
    %45 = arith.cmpf oge, %40, %44 : vector<1x64xf32>
    %c64_i32 = arith.constant 64 : i32
    %46 = vector.broadcast %c64_i32 : i32 to vector<1x64xi32>
    %47 = arith.select %45, %41, %46 : vector<1x64xi1>, vector<1x64xi32>
    %cst_9 = arith.constant dense<2147483647> : vector<1xi32>
    %48 = vector.multi_reduction <minsi>, %47, %cst_9 [1] : vector<1x64xi32> to vector<1xi32>
    %49 = vector.shape_cast %48 : vector<1xi32> to vector<1x1xi32>
    %50 = vector.broadcast %49 : vector<1x1xi32> to vector<1x64xi32>
    %51 = arith.cmpi eq, %41, %50 : vector<1x64xi32>
    %cst_10 = arith.constant -1.000000e+00 : f32
    %52 = vector.broadcast %cst_10 : f32 to vector<1x1xf32>
    %53 = arith.cmpf ogt, %43, %52 : vector<1x1xf32>
    %54 = arith.extui %53 : vector<1x1xi1> to vector<1x1xi32>
    %55 = arith.sitofp %54 : vector<1x1xi32> to vector<1x1xf32>
    %cst_11 = arith.constant 0.000000e+00 : f32
    %56 = vector.shape_cast %51 : vector<1x64xi1> to vector<1x64xi1>
    %57 = vector.broadcast %56 : vector<1x64xi1> to vector<4x64xi1>
    %58 = vector.broadcast %cst_11 : f32 to vector<4x64xf32>
    %59 = arith.select %57, %4, %58 : vector<4x64xi1>, vector<4x64xf32>
    %cst_12 = arith.constant dense<0.000000e+00> : vector<4xf32>
    %60 = vector.multi_reduction <add>, %59, %cst_12 [1] : vector<4x64xf32> to vector<4xf32>
    %61 = vector.shape_cast %60 : vector<4xf32> to vector<4x1xf32>
    %62 = vector.broadcast %55 : vector<1x1xf32> to vector<4x1xf32>
    %63 = arith.mulf %61, %62 : vector<4x1xf32>
    %cst_13 = arith.constant 0.000000e+00 : f32
    %64 = vector.shape_cast %51 : vector<1x64xi1> to vector<1x64xi1>
    %65 = vector.broadcast %64 : vector<1x64xi1> to vector<4x64xi1>
    %66 = vector.broadcast %cst_13 : f32 to vector<4x64xf32>
    %67 = arith.select %65, %6, %66 : vector<4x64xi1>, vector<4x64xf32>
    %cst_14 = arith.constant dense<0.000000e+00> : vector<4xf32>
    %68 = vector.multi_reduction <add>, %67, %cst_14 [1] : vector<4x64xf32> to vector<4xf32>
    %69 = vector.shape_cast %68 : vector<4xf32> to vector<4x1xf32>
    %70 = vector.broadcast %55 : vector<1x1xf32> to vector<4x1xf32>
    %71 = arith.mulf %69, %70 : vector<4x1xf32>
    %72 = arith.index_cast %arg0 : i32 to index
    %73 = memref.load %arg1[%72] : memref<8xi32, #tpu.memory_space<smem>>
    %74 = arith.sitofp %73 : i32 to f32
    %75 = arith.subf %71, %63 : vector<4x1xf32>
    %76 = vector.broadcast %74 : f32 to vector<4x1xf32>
    %77 = arith.mulf %76, %75 : vector<4x1xf32>
    %78 = arith.addf %63, %77 : vector<4x1xf32>
    %79 = arith.subf %63, %71 : vector<4x1xf32>
    %80 = vector.broadcast %74 : f32 to vector<4x1xf32>
    %81 = arith.mulf %80, %79 : vector<4x1xf32>
    %82 = arith.addf %71, %81 : vector<4x1xf32>
    %83 = arith.cmpf one, %82, %82 : vector<4x1xf32>
    %cst_15 = arith.constant 0.000000e+00 : f32
    %84 = vector.broadcast %cst_15 : f32 to vector<4x1xf32>
    %85 = arith.select %83, %84, %82 : vector<4x1xi1>, vector<4x1xf32>
    %86 = arith.subf %78, %85 : vector<4x1xf32>
    %87 = math.absf %86 : vector<4x1xf32>
    %cst_16 = arith.constant 0.111111112 : f32
    %88 = vector.broadcast %cst_16 : f32 to vector<4x1xf32>
    %89 = arith.cmpf olt, %87, %88 : vector<4x1xf32>
    %cst_17 = arith.constant 5.000000e-01 : f32
    %90 = vector.broadcast %cst_17 : f32 to vector<4x1xf32>
    %91 = arith.mulf %90, %87 : vector<4x1xf32>
    %92 = arith.mulf %91, %87 : vector<4x1xf32>
    %cst_18 = arith.constant 0.111111112 : f32
    %93 = vector.broadcast %cst_18 : f32 to vector<4x1xf32>
    %94 = arith.divf %92, %93 : vector<4x1xf32>
    %cst_19 = arith.constant 0.055555556 : f32
    %95 = vector.broadcast %cst_19 : f32 to vector<4x1xf32>
    %96 = arith.subf %87, %95 : vector<4x1xf32>
    %97 = arith.select %89, %94, %96 : vector<4x1xi1>, vector<4x1xf32>
    %c0_20 = arith.constant 0 : index
    %c0_21 = arith.constant 0 : index
    %98 = vector.load %arg4[%c0_20, %c0_21] : memref<1x1xf32, #tpu.memory_space<vmem>>, vector<1x1xf32>
    %cst_22 = arith.constant dense<0.000000e+00> : vector<1xf32>
    %99 = vector.multi_reduction <add>, %97, %cst_22 [0] : vector<4x1xf32> to vector<1xf32>
    %100 = vector.shape_cast %99 : vector<1xf32> to vector<1x1xf32>
    %101 = arith.addf %98, %100 : vector<1x1xf32>
    %c0_23 = arith.constant 0 : index
    %c0_24 = arith.constant 0 : index
    %102 = vector.load %arg4[%c0_23, %c0_24] : memref<1x1xf32, #tpu.memory_space<vmem>>, vector<1x1xf32>
    tpu.vector_store %arg4[%c0_23, %c0_24], %101 {strides = array<i32>} : memref<1x1xf32, #tpu.memory_space<vmem>>, vector<1x1xf32>,
    return
  }
  func.func @transform_0(%arg0: i32, %arg1: memref<8xi32, #tpu.memory_space<smem>>) -> (i32, i32, i32) {
    %c0_i32 = arith.constant 0 : i32
    %c0_i32_0 = arith.constant 0 : i32
    %c0_i32_1 = arith.constant 0 : i32
    return %arg0, %c0_i32, %c0_i32_0 : i32, i32, i32
  }
  func.func @transform_1(%arg0: i32, %arg1: memref<8xi32, #tpu.memory_space<smem>>) -> (i32, i32, i32) {
    %c0_i32 = arith.constant 0 : i32
    %c0_i32_0 = arith.constant 0 : i32
    %c0_i32_1 = arith.constant 0 : i32
    return %arg0, %c0_i32, %c0_i32_0 : i32, i32, i32
  }
  func.func @transform_2(%arg0: i32, %arg1: memref<8xi32, #tpu.memory_space<smem>>) -> (i32, i32) {
    %c0_i32 = arith.constant 0 : i32
    %c0_i32_0 = arith.constant 0 : i32
    %c0_i32_1 = arith.constant 0 : i32
    return %c0_i32, %c0_i32_0 : i32, i32
  }
}

</mosaic_0001>

<llo_original>
// kernel: _constellation_loss_device.1
$region0: #{_constellation_loss_device.1}
  #allocation0 [shape = 'u32[]', space=smem, size = 0x4, offset = 0x4, fixed_abs, tag = 'smem constant byte address 0x4 - core index']
  #allocation1 [shape = 'u32[144,128]{1,0:T(1,128)}', space=vmem, size = 0x12000, scoped, tag = 'internal scratch']
  #allocation2 [shape = 's32[1]{0}', space=sflag, size = 0x4, scoped, tag = 'scoped memory for _constellation_loss_device.1']
  #allocation3 [shape = 'u8[512]{0}', space=smem, size = 0x200, scoped, tag = 'prefetched SMEM operand 0']
  %s0 = inlined_call_operand.hbm [shape: s32[8], index: 0, kind: input, shape index: {}]
  %s1 = inlined_call_operand.hbm [shape: f32[8,4,64], index: 1, kind: input, shape index: {}]
  %s2 = inlined_call_operand.hbm [shape: f32[8,4,64], index: 2, kind: input, shape index: {}]
  %s3 = inlined_call_operand.hbm [shape: f32[1,1], index: 3, kind: output, shape index: {}]
  %s4 = sld [smem:[#allocation0]]
  $region53: #{_constellation_loss_device.1} parent=0
    _
  %s6 = ssub.s32 1, %s4
  %s7 = scalar_select 0, %s6, %s4
  %9 = dma.hbm_to_smem %s0, 16, [#allocation3], [#allocation2]
  %10 = dma.done [#allocation2], 16
  %11 = sfence
  $region1: #{_constellation_loss_device.1} parent=0
    #allocation4 [shape = 'u8[4096]{0}', space=vmem, size = 0x1000, scoped, tag = 'input window, operand 1']
    #allocation5 [shape = 's32[2]{0}', space=sflag, size = 0x8, scoped, tag = 'scoped memory for _constellation_loss_device.1']
    #allocation6 [shape = 's32[2]{0}', space=sflag, size = 0x8, scoped, tag = 'scoped memory for _constellation_loss_device.1']
    #allocation7 [shape = 'u8[4096]{0}', space=vmem, size = 0x1000, scoped, tag = 'input window, operand 2']
    #allocation8 [shape = 's32[2]{0}', space=sflag, size = 0x8, scoped, tag = 'scoped memory for _constellation_loss_device.1']
    #allocation9 [shape = 'u8[512]{0}', space=vmem, size = 0x400, scoped, tag = 'output window, operand 0, single buffered']
    %12 = vsyncpa [#allocation5], 0
    %s13 = scalar_lea.sflag [#allocation5], 1
    %14 = vsyncpa %s13, 0
    %15 = vsyncpa [#allocation8], 0
    %s16 = scalar_lea.sflag [#allocation8], 1
    %17 = vsyncpa %s16, 0
    %18 = vsyncpa [#allocation6], 0
    loop: start=0, step=1, limit=10
    $region2: #{_constellation_loss_device.1} parent=1 // loop_pre_header
      _
    $region3: #{_constellation_loss_device.1} parent=1 // loop_header
      %s20 = sphi 0, %s24
      %p21 = scmp.ge.s32.totalorder %s20, 10
      %s30 = sphi 0, %s32
      %s33 = sphi 0, %s30
      %s34 = sphi 0, %s33
      %s50 = sphi 0, %s34
      %s56 = sphi 0, %s58
      %s59 = sphi 0, %s56
      %s60 = sphi 0, %s59
      %s76 = sphi 0, %s60
      %s80 = sphi 0, %s80
      %s82 = sphi 0, %s80
      %s83 = sphi 0, %s82
      %s97 = sphi 0, %s83
    $region4: #{_constellation_loss_device.1} parent=1 // loop_header_branch
      %23 = sbr.rel (%p21) target = $region8
    $region5: #{_constellation_loss_device.1} parent=1 // loop_body
      %s25 = ssub.s32 %s20, 1
      %s26 = ssub.s32 %s20, 2
      %s27 = sadd.s32 %s20, 1
      %s28 = ssub.s32 %s20, %s27
      %p29 = scmp.eq.s32.totalorder %s28, 0
      %s31 = sadd.s32 %s30, 1
      %s32 = scalar_select %p29, %s30, %s31
      %p35 = pneg %p29
      %p36 = scmp.eq.s32.totalorder %s20, 7
      %p37 = por %p35, %p36
      %p38 = scmp.ne.s32.totalorder %s30, %s33
      %p39 = scmp.eq.s32.totalorder %s20, 0
      %p40 = por %p38, %p39
      %p41 = scmp.ne.s32.totalorder %s30, %s33
      %p42 = scmp.eq.s32.totalorder %s25, 7
      %p43 = por %p41, %p42
      %p44 = scmp.ne.s32.totalorder %s33, %s34
      %p45 = scmp.eq.s32.totalorder %s25, 0
      %p46 = por %p44, %p45
      %p47 = scmp.ne.s32.totalorder %s33, %s34
      %p48 = scmp.eq.s32.totalorder %s26, 7
      %p49 = por %p47, %p48
      %p51 = scmp.ne.s32.totalorder %s34, %s50
      %p52 = scmp.eq.s32.totalorder %s26, 0
      %p53 = por %p51, %p52
      %s54 = ssub.s32 %s20, %s27
      %p55 = scmp.eq.s32.totalorder %s54, 0
      %s57 = sadd.s32 %s56, 1
      %s58 = scalar_select %p55, %s56, %s57
      %p61 = pneg %p55
      %p62 = scmp.eq.s32.totalorder %s20, 7
      %p63 = por %p61, %p62
      %p64 = scmp.ne.s32.totalorder %s56, %s59
      %p65 = scmp.eq.s32.totalorder %s20, 0
      %p66 = por %p64, %p65
      %p67 = scmp.ne.s32.totalorder %s56, %s59
      %p68 = scmp.eq.s32.totalorder %s25, 7
      %p69 = por %p67, %p68
      %p70 = scmp.ne.s32.totalorder %s59, %s60
      %p71 = scmp.eq.s32.totalorder %s25, 0
      %p72 = por %p70, %p71
      %p73 = scmp.ne.s32.totalorder %s59, %s60
      %p74 = scmp.eq.s32.totalorder %s26, 7
      %p75 = por %p73, %p74
      %p77 = scmp.ne.s32.totalorder %s60, %s76
      %p78 = scmp.eq.s32.totalorder %s26, 0
      %p79 = por %p77, %p78
      %s81 = sadd.s32 %s80, 1
      %p84 = scmp.eq.s32.totalorder %s20, 7
      %p85 = scmp.ne.s32.totalorder %s80, %s82
      %p86 = scmp.eq.s32.totalorder %s20, 0
      %p87 = por %p85, %p86
      %p88 = scmp.ne.s32.totalorder %s80, %s82
      %p89 = scmp.eq.s32.totalorder %s25, 7
      %p90 = por %p88, %p89
      %p91 = scmp.ne.s32.totalorder %s82, %s83
      %p92 = scmp.eq.s32.totalorder %s25, 0
      %p93 = por %p91, %p92
      %p94 = scmp.ne.s32.totalorder %s82, %s83
      %p95 = scmp.eq.s32.totalorder %s26, 7
      %p96 = por %p94, %p95
      %p98 = scmp.ne.s32.totalorder %s83, %s97
      %p99 = scmp.eq.s32.totalorder %s26, 0
      %p100 = por %p98, %p99
      %p101 = scmp.le.s32.totalorder 1, %s20
      %p102 = scmp.lt.s32.totalorder %s20, 9
      %p103 = pnand %p101, %p102
      %p104 = pneg %p103
      // Predicated region
      $region9: #{_constellation_loss_device.1} parent=5 // pred_check
        _
      $region10: #{_constellation_loss_device.1} parent=5 // pred_check_branch
        %106 = sbr.rel (%p103) target = $region12
      $region11: #{_constellation_loss_device.1} parent=5 // pred_region
        %s107 = ssub.s32 %s20, 1
      $region12: #{_constellation_loss_device.1} parent=5 // pred_fallthru
        _
      %p108 = scmp.lt.s32.totalorder %s20, 8
      // Predicated region
      $region13: #{_constellation_loss_device.1} parent=5 // pred_check
        %p109 = pneg %p108
      $region14: #{_constellation_loss_device.1} parent=5 // pred_check_branch
        %111 = sbr.rel (%p109) target = $region16
      $region15: #{_constellation_loss_device.1} parent=5 // pred_region
        // Predicated region
        $region17: #{_constellation_loss_device.1} parent=15 // pred_check
          %p112 = pneg %p40
        $region18: #{_constellation_loss_device.1} parent=15 // pred_check_branch
          %114 = sbr.rel (%p112) target = $region20
        $region19: #{_constellation_loss_device.1} parent=15 // pred_region
          %s115 = sand.u32 %s30, 1
          %s116 = scalar_lea.sflag [#allocation5], %s115
          %s117 = sand.u32 %s30, 1
          %s118 = smul.addr %s117, 4
          %s119 = scalar_lea.vmem [#allocation4], %s118
          %s121 = ssub.s32 64, 64
          %122 = vsyncadd %s116, %s121
          %s123 = smul.addr %s20, 64
          %s124 = scalar_lea.hbm %s1, %s123
          %s126 = sshll.u32 %s119, 4
          %s127 = int_to_ptr.vmem [resolvable:$true] %s126
          %129 = dma.hbm_to_vmem [thread:$0]  %s124, 64, %s127, %s116
        $region20: #{_constellation_loss_device.1} parent=15 // pred_fallthru
          _
        // Predicated region
        $region21: #{_constellation_loss_device.1} parent=15 // pred_check
          %p130 = pneg %p66
        $region22: #{_constellation_loss_device.1} parent=15 // pred_check_branch
          %132 = sbr.rel (%p130) target = $region24
        $region23: #{_constellation_loss_device.1} parent=15 // pred_region
          %s133 = sand.u32 %s56, 1
          %s134 = scalar_lea.sflag [#allocation8], %s133
          %s135 = sand.u32 %s56, 1
          %s136 = smul.addr %s135, 4
          %s137 = scalar_lea.vmem [#allocation7], %s136
          %s139 = ssub.s32 64, 64
          %140 = vsyncadd %s134, %s139
          %s141 = smul.addr %s20, 64
          %s142 = scalar_lea.hbm %s2, %s141
          %s144 = sshll.u32 %s137, 4
          %s145 = int_to_ptr.vmem [resolvable:$true] %s144
          %147 = dma.hbm_to_vmem [thread:$0]  %s142, 64, %s145, %s134
        $region24: #{_constellation_loss_device.1} parent=15 // pred_fallthru
          _
      $region16: #{_constellation_loss_device.1} parent=5 // pred_fallthru
        _
      %p148 = scmp.le.s32.totalorder 1, %s20
      %p149 = scmp.lt.s32.totalorder %s20, 9
      %p150 = pnand %p148, %p149
      %p151 = pneg %p150
      // Predicated region
      $region25: #{_constellation_loss_device.1} parent=5 // pred_check
        _
      $region26: #{_constellation_loss_device.1} parent=5 // pred_check_branch
        %153 = sbr.rel (%p150) target = $region28
      $region27: #{_constellation_loss_device.1} parent=5 // pred_region
        %s154 = ssub.s32 %s20, 1
        %s155 = sand.u32 %s33, 1
        %s156 = scalar_lea.sflag [#allocation5], %s155
        %s157 = sand.u32 %s33, 1
        %s158 = smul.addr %s157, 4
        %s159 = scalar_lea.vmem [#allocation4], %s158
        // Predicated region
        $region29: #{_constellation_loss_device.1} parent=27 // pred_check
          %p160 = pneg %p46
        $region30: #{_constellation_loss_device.1} parent=27 // pred_check_branch
          %162 = sbr.rel (%p160) target = $region32
        $region31: #{_constellation_loss_device.1} parent=27 // pred_region
          %163 = dma.done %s156, 64
        $region32: #{_constellation_loss_device.1} parent=27 // pred_fallthru
          _
        %s164 = sand.u32 %s59, 1
        %s165 = scalar_lea.sflag [#allocation8], %s164
        %s166 = sand.u32 %s59, 1
        %s167 = smul.addr %s166, 4
        %s168 = scalar_lea.vmem [#allocation7], %s167
        // Predicated region
        $region33: #{_constellation_loss_device.1} parent=27 // pred_check
          %p169 = pneg %p72
        $region34: #{_constellation_loss_device.1} parent=27 // pred_check_branch
          %171 = sbr.rel (%p169) target = $region36
        $region35: #{_constellation_loss_device.1} parent=27 // pred_region
          %172 = dma.done %s165, 64
        $region36: #{_constellation_loss_device.1} parent=27 // pred_fallthru
          _
        %s173 = sand.u32 %s33, 1
        %s174 = scalar_lea.sflag [#allocation5], %s173
        %s175 = sand.u32 %s33, 1
        %s176 = smul.addr %s175, 4
        %s177 = scalar_lea.vmem [#allocation4], %s176
        %p178 = pneg %p46
        %p179 = pneg %p43
        %s180 = sand.u32 %s59, 1
        %s181 = scalar_lea.sflag [#allocation8], %s180
        %s182 = sand.u32 %s59, 1
        %s183 = smul.addr %s182, 4
        %s184 = scalar_lea.vmem [#allocation7], %s183
        %p185 = pneg %p72
        %p186 = pneg %p69
        %p187 = pneg %p93
        %p188 = pneg %p90
        %p189 = scmp.eq.s32.totalorder %s25, 0
        // Predicated region
        $region37: #{_constellation_loss_device.1} parent=27 // pred_check
          %p190 = pneg %p189
        $region38: #{_constellation_loss_device.1} parent=27 // pred_check_branch
          %192 = sbr.rel (%p190) target = $region40
        $region39: #{_constellation_loss_device.1} parent=27 // pred_region
          %vm193 = vcmask 0
          %194 = vst.msk [vmem:[#allocation9] sm:$0x1] %vm193, 0.0
        $region40: #{_constellation_loss_device.1} parent=27 // pred_fallthru
          _
        %v195 = vld [vmem:[%s159] sm:$0xf]
        %v196 = vld [vmem:[%s168] sm:$0xf]
        %v197 = vmax.f32 %v195, %v196
        %v198 = vmin.f32 %v195, %v196
        %v200 = vrot.slane %v197, 6
        %v202 = vsub.f32 %v198, %v200
        %v204 = vrot.slane %v202, 1
        %v206 = vmul.f32 %v202, %v204
        %v208 = vrot.slane %v195, 6
        %v210 = vsub.f32 %v195, %v208
        %v212 = vrot.slane %v210, 1
        %v214 = vmul.f32 %v210, %v212
        %v216 = vrot.slane %v196, 6
        %v218 = vsub.f32 %v196, %v216
        %v220 = vrot.slane %v218, 1
        %v222 = vmul.f32 %v218, %v220
        %vm223 = vcmp.lt.f32.partialorder %v198, %v200
        %v224 = vsel %vm223, 1, 0
        %v225 = vrot.slane %v224, 1
        %vm226 = vcmp.ne.s32.totalorder %v225, 0
        %vm227 = vmor %vm223, %vm226
        %vm228 = vcmp.lt.f32.partialorder %v206, 5.0
        %vm229 = vmor %vm227, %vm228
        %v230 = vadd.f32 %v214, %v222
        %v231 = vsub.f32 %v230, %v206
        %v232 = vsel %vm229, 1.0, %v231
        %v233 = vrcp.pop %v232
        %v234 = vmul.f32 %v206, %v233
        %v235 = vsel %vm229, -1.0, %v234
        %v236 = vlaneseq
        %v237 = vand.u32 %v236, 127
        %vm238 = vcmask 518146
        %v239 = vsel %vm238, %v235, -inf
        %240 = vmax.xlane.f32.xlu0 %v239
        %v241 = vpop.xlane.xlu0 %240
        %vm242 = vcmp.ge.f32.partialorder %v235, %v241
        %v243 = vsel %vm242, %v237, 64
        %v244 = vsel %vm238, %v243, 2147483647
        %v245 = vand.u32 %v244, 65535
        %v246 = vshra.s32 %v244, 16
        %v247 = vcvt.s32.f32 %v245
        %v248 = vcvt.s32.f32 %v246
        %249 = vmin.xlane.f32.xlu0 %v248
        %v250 = vpop.xlane.xlu0 %249
        %vm251 = vcmp.eq.f32.partialorder %v248, %v250
        %v252 = vsel %vm251, %v247, inf
        %253 = vmin.xlane.f32.xlu0 %v252
        %v254 = vpop.xlane.xlu0 %253
        %v255 = vcvt.f32.s32 %v254
        %v256 = vcvt.f32.s32 %v250
        %v257 = vshll.u32 %v256, 16
        %v258 = vadd.s32 %v257, %v255
        %vm259 = vcmp.eq.s32.totalorder %v237, %v258
        %vm260 = vcmp.gt.f32.partialorder %v241, -1.0
        %v261 = vsel %vm260, 1, 0
        %v262 = vcvt.s32.f32 %v261
        %v263 = vsel %vm259, 1, 0
        %v264 = vlaneseq
        %v265 = vshrl.u32 %v264, 7
        %v266 = vsub.s32 2, %v265
        %v267 = vrot.slane %v263, %v266
        %vm268 = vcmp.eq.s32.totalorder %v267, 1
        %v269 = vsel %vm268, %v195, 0.0
        %vm270 = vcmask 519168
        %v271 = vsel %vm270, %v269, 0.0
        %272 = vadd.xlane.f32.xlu0 %v271
        %v273 = vpop.xlane.xlu0 %272
        %v274 = vlaneseq
        %v275 = vshrl.u32 %v274, 7
        %v276 = vsub.s32 2, %v275
        %v277 = vrot.slane %v262, %v276
        %v278 = vmul.f32 %v273, %v277
        %v279 = vsel %vm268, %v196, 0.0
        %v280 = vsel %vm270, %v279, 0.0
        %281 = vadd.xlane.f32.xlu0 %v280
        %v282 = vpop.xlane.xlu0 %281
        %v283 = vmul.f32 %v282, %v277
        %s284 = sld [smem:[#allocation3 + %s25]]
        %s285 = scvt.s32.f32 %s284
        %v286 = vsub.f32 %v283, %v278
        %v287 = vstv %s285
        %v288 = vmul.f32 %v287, %v286
        %v289 = vadd.f32 %v278, %v288
        %v290 = vsub.f32 %v278, %v283
        %v291 = vmul.f32 %v287, %v290
        %v292 = vadd.f32 %v283, %v291
        %vm293 = vcmp.ne.f32.partialorder %v292, %v292
        %v294 = vsel %vm293, 0.0, %v292
        %v295 = vsub.f32 %v289, %v294
        %v296 = vand.u32 2147483647, %v295
        %vm297 = vcmp.lt.f32.partialorder %v296, 0.11111111
        %v298 = vmul.f32 %v296, 0.5
        %v299 = vmul.f32 %v298, %v296
        %v300 = vrcp.pop 0.11111111
        %v301 = vmul.f32 %v299, %v300
        %v302 = vsub.f32 %v296, 0.055555556
        %v303 = vsel %vm297, %v301, %v302
        %v304 = vld [vmem:[#allocation9] sm:$0x1]
        %vm305 = vcmask 1043456
        %v306 = vsel %vm305, %v303, 0.0
        %v307 = vrot.slane %v306, 4
        %v308 = vadd.f32 %v306, %v307
        %v309 = vrot.slane %v308, 2
        %v310 = vadd.f32 %v308, %v309
        %v311 = vrot.slane %v310, 1
        %v312 = vadd.f32 %v310, %v311
        %v313 = vadd.f32 %v304, %v312
        %vm314 = vcmask 0
        %315 = vst.msk [vmem:[#allocation9] sm:$0x1] %vm314, %v313
        // Predicated region
        $region41: #{_constellation_loss_device.1} parent=27 // pred_check
          %p316 = pneg %p90
        $region42: #{_constellation_loss_device.1} parent=27 // pred_check_branch
          %318 = sbr.rel (%p316) target = $region44
        $region43: #{_constellation_loss_device.1} parent=27 // pred_region
          %s320 = ssub.s32 16, 16
          %321 = vsyncadd [#allocation6], %s320
          %s323 = sshll.u32 [#allocation9], 4
          %s324 = int_to_ptr.vmem [resolvable:$true] %s323
          %326 = dma.vmem_to_hbm [thread:$0]  %s324, 16, %s3, [#allocation6]
        $region44: #{_constellation_loss_device.1} parent=27 // pred_fallthru
          _
        // Predicated region
        $region45: #{_constellation_loss_device.1} parent=27 // pred_check
          %p327 = pneg %p90
        $region46: #{_constellation_loss_device.1} parent=27 // pred_check_branch
          %329 = sbr.rel (%p327) target = $region48
        $region47: #{_constellation_loss_device.1} parent=27 // pred_region
          %330 = dma.done [#allocation6], 16
        $region48: #{_constellation_loss_device.1} parent=27 // pred_fallthru
          _
      $region28: #{_constellation_loss_device.1} parent=5 // pred_fallthru
        _
      %p331 = scmp.le.s32.totalorder 2, %s20
      // Predicated region
      $region49: #{_constellation_loss_device.1} parent=5 // pred_check
        %p332 = pneg %p331
      $region50: #{_constellation_loss_device.1} parent=5 // pred_check_branch
        %334 = sbr.rel (%p332) target = $region52
      $region51: #{_constellation_loss_device.1} parent=5 // pred_region
        %s335 = ssub.s32 %s20, 2
      $region52: #{_constellation_loss_device.1} parent=5 // pred_fallthru
        _
    $region6: #{_constellation_loss_device.1} parent=1 // loop_footer
      %s24 = sadd.s32 1, %s20
    $region7: #{_constellation_loss_device.1} parent=1 // loop_footer_branch
      %19 = sbr.rel target = $region3
    $region8: #{_constellation_loss_device.1} parent=1 // loop_exit
      _
    %336 = vsyncpa [#allocation5], 1
    %s337 = scalar_lea.sflag [#allocation5], 1
    %338 = vsyncpa %s337, 1
    %339 = vsyncpa [#allocation8], 1
    %s340 = scalar_lea.sflag [#allocation8], 1
    %341 = vsyncpa %s340, 1
    %342 = vsyncpa [#allocation6], 1
    %s343 = scalar_lea.sflag [#allocation6], 1
    %344 = vsyncpa %s343, 1

</llo_original>
